<compile_context>
chip_gen: v5e
topology: v5e:2x2
jax: 0.10.0
libtpu: 0.0.40
codegen_flags: <defaults>
</compile_context>

<pallas_src>
import functools

import jax
import jax.numpy as jnp
from jax.experimental import pallas as pl
from jax.experimental.pallas import tpu as pltpu

_LANE = 128
_SUBLANE = 8
_BLOCK_BYTES = 4 * 1024 * 1024        # ~4 MiB per block
_VMEM_LIMIT_BYTES = 32 * 1024 * 1024  # 2 bufs x (in + out) x 4 MiB + slack


def _cdiv(a, b):
    return -(-a // b)


def _round_up(n, m):
    return _cdiv(n, m) * m


def _fake_quant_kernel(delta_ref, zp_ref, x_ref, o_ref, *, qmax):
    """Elementwise fake-quant: round(x/delta)+zp, clamp to [0, qmax], dequant."""
    d = delta_ref[0, 0]
    zp = zp_ref[0, 0]
    # Upcast to f32 in-register so rounding/clipping matches the f32 reference
    # even for bf16 inputs; downcast only on the final store.
    x = x_ref[...].astype(jnp.float32)
    x_int = jnp.round(x / d) + zp
    x_quant = jnp.clip(x_int, 0.0, qmax)
    o_ref[...] = ((x_quant - zp) * d).astype(o_ref.dtype)


def _prepare_2d(x):
    """Free (contiguous) reshape of x onto a 2-D slab.

    Returns (x2d, orig_numel_or_None); the second value is non-None only on the
    rare minimal-pad fallback path.
    """
    n = x.size
    itemsize = jnp.dtype(x.dtype).itemsize
    if n % _LANE == 0:
        lane = _LANE
        for cand in (512, 256):                 # wider lane-dense slab when free
            if n % cand == 0 and n // cand >= _SUBLANE:
                lane = cand
                break
        return x.reshape(n // lane, lane), None
    if x.ndim >= 2 and x.shape[-1] * _SUBLANE * itemsize <= _BLOCK_BYTES:
        # Misaligned numel: keep the native last dim (full-extent block on the
        # lane axis) so no pad / slice-back HBM copies are needed; Pallas masks
        # the ragged last row block. Stores are lane-masked but only one pass.
        return x.reshape(-1, x.shape[-1]), None
    # Rare fallback (e.g. a huge prime-length 1-D input): minimal pad to a
    # (rows, 128) slab. Costs one extra HBM round trip on this path only.
    flat = x.reshape(-1)
    flat = jnp.pad(flat, (0, (-n) % _LANE))
    return flat.reshape(-1, _LANE), n


def uniform_affine_quantize(x, delta=1.0, zero_point=0.0, n_bits=8):
    """Pallas implementation of UniformAffineQuantizer.forward (inited=True path).

    `delta` / `zero_point` may be Python floats or (traced) JAX scalars; only
    tensor-wise (scalar) quantization parameters are supported.
    """
    assert 2 <= n_bits <= 8, "bitwidth not supported"
    # TODO(synk): channel_wise=True (per-channel delta/zero_point), the MSE-based
    # init_quantization_scale calibration search, and the qdrop branch
    # (is_training and prob < 1.0, torch.rand_like) are not implemented; they are
    # inactive on the module's default inference-time forward path.
    n_levels = 2 ** n_bits

    orig_shape = x.shape
    if x.size == 0:
        return x

    x2d, orig_numel = _prepare_2d(x)
    rows, lane = x2d.shape
    itemsize = jnp.dtype(x.dtype).itemsize

    # Balanced row tiling: ~_BLOCK_BYTES per block, rows split evenly across the
    # grid (no near-empty tail block), and an even >= 2 step count whenever there
    # is enough data so both TensorCores are fed on v7x (no-op on v5e/v6e).
    target_rows = max(_SUBLANE, _BLOCK_BYTES // (lane * itemsize))
    nsteps = _cdiv(rows, target_rows)
    if rows >= 2 * _SUBLANE:
        nsteps = max(nsteps, 2)
        if nsteps % 2:
            nsteps += 1
    tm = _round_up(_cdiv(rows, nsteps), _SUBLANE)
    if tm >= rows:
        tm = rows                      # single full-extent block (always legal)
    grid = (_cdiv(rows, tm),)

    # Runtime scalars in SMEM (no trace-time concretization, no recompiles).
    delta_arr = jnp.asarray(delta, dtype=jnp.float32).reshape(1, 1)
    zp_arr = jnp.asarray(zero_point, dtype=jnp.float32).reshape(1, 1)

    kernel = functools.partial(_fake_quant_kernel, qmax=float(n_levels - 1))

    out2d = pl.pallas_call(
        kernel,
        out_shape=jax.ShapeDtypeStruct((rows, lane), x.dtype),
        grid=grid,
        in_specs=[
            pl.BlockSpec(memory_space=pltpu.MemorySpace.SMEM),   # delta
            pl.BlockSpec(memory_space=pltpu.MemorySpace.SMEM),   # zero_point
            pl.BlockSpec((tm, lane), lambda i: (i, 0)),
        ],
        out_specs=pl.BlockSpec((tm, lane), lambda i: (i, 0)),
        compiler_params=pltpu.CompilerParams(
            dimension_semantics=("parallel",),
            vmem_limit_bytes=_VMEM_LIMIT_BYTES),
    )(delta_arr, zp_arr, x2d)

    if orig_numel is not None:         # rare pad-fallback path only
        return out2d.reshape(-1)[:orig_numel].reshape(orig_shape)
    return out2d.reshape(orig_shape)


def _reference(x, delta=1.0, zero_point=0.0, n_bits=8):
    n_levels = 2 ** n_bits
    xf = x.astype(jnp.float32)
    x_int = jnp.round(xf / delta) + zero_point
    x_quant = jnp.clip(x_int, 0, n_levels - 1)
    return ((x_quant - zero_point) * delta).astype(x.dtype)


if __name__ == "__main__":
    key = jax.random.PRNGKey(0)

    # Check 1: module defaults (delta=1, zp=0, 8-bit), f32 NCHW input; numel=2048
    # is 128-aligned -> lane-dense (8, 256) slab, no padding.
    x = jax.random.normal(key, (2, 4, 16, 16), dtype=jnp.float32) * 8.0 + 4.0
    y = jax.block_until_ready(uniform_affine_quantize(x))
    y_ref = _reference(x)
    assert y.shape == x.shape and y.dtype == x.dtype
    assert jnp.allclose(y, y_ref, atol=1e-6), "mismatch vs reference (f32)"

    # Check 2: bf16 input with numel=945 (not a multiple of 128) -> native
    # (105, 9) view, no pad / slice-back HBM copies.
    xb = (jax.random.normal(jax.random.PRNGKey(1), (3, 5, 7, 9), jnp.float32)
          * 8.0 + 4.0).astype(jnp.bfloat16)
    yb = jax.block_until_ready(uniform_affine_quantize(xb))
    yb_ref = _reference(xb)
    assert yb.shape == xb.shape and yb.dtype == xb.dtype
    assert jnp.allclose(yb.astype(jnp.float32), yb_ref.astype(jnp.float32),
                        atol=1e-6), "mismatch vs reference (bf16)"

    # Check 3: traced (learned) delta / zero_point under jit at 4 bits —
    # exercises the SMEM-scalar path (no trace-time float(), single compile).
    delta_t = jnp.float32(0.25)
    zp_t = jnp.float32(3.0)
    quant4 = jax.jit(lambda a, d, z: uniform_affine_quantize(a, d, z, n_bits=4))
    y3 = jax.block_until_ready(quant4(x, delta_t, zp_t))
    y3_ref = _reference(x, 0.25, 3.0, n_bits=4)
    assert jnp.allclose(y3, y3_ref, atol=1e-6), "mismatch vs reference (traced params)"

    print("KERNEL_OK")
</pallas_src>

<mosaic_0001>
module attributes {stable_mosaic.version = 11 : i64} {
  func.func @_fake_quant_kernel(%arg0: i32, %arg1: memref<1x1xf32, #tpu.memory_space<smem>>, %arg2: memref<1x1xf32, #tpu.memory_space<smem>>, %arg3: memref<8x256xf32, #tpu.memory_space<vmem>>, %arg4: memref<8x256xf32, #tpu.memory_space<vmem>>) attributes {dimension_semantics = [#tpu.dimension_semantics<parallel>], iteration_bounds = array<i64: 1>, scalar_prefetch = 0 : i64, scratch_operands = 0 : i64, tpu.core_type = #tpu.core_type<tc>, window_params = [{transform_indices = @transform_0, window_bounds = array<i64: 1, 1>}, {transform_indices = @transform_1, window_bounds = array<i64: 1, 1>}, {transform_indices = @transform_2, window_bounds = array<i64: 8, 256>}, {transform_indices = @transform_3, window_bounds = array<i64: 8, 256>}]} {
    %c0 = arith.constant 0 : index
    %c0_0 = arith.constant 0 : index
    %0 = memref.load %arg1[%c0, %c0_0] : memref<1x1xf32, #tpu.memory_space<smem>>
    %c0_1 = arith.constant 0 : index
    %c0_2 = arith.constant 0 : index
    %1 = memref.load %arg2[%c0_1, %c0_2] : memref<1x1xf32, #tpu.memory_space<smem>>
    %c0_3 = arith.constant 0 : index
    %c0_4 = arith.constant 0 : index
    %2 = vector.load %arg3[%c0_3, %c0_4] : memref<8x256xf32, #tpu.memory_space<vmem>>, vector<8x256xf32>
    %3 = vector.broadcast %0 : f32 to vector<8x256xf32>
    %4 = arith.divf %2, %3 : vector<8x256xf32>
    %5 = math.roundeven %4 : vector<8x256xf32>
    %6 = vector.broadcast %1 : f32 to vector<8x256xf32>
    %7 = arith.addf %5, %6 : vector<8x256xf32>
    %cst = arith.constant 0.000000e+00 : f32
    %cst_5 = arith.constant 2.550000e+02 : f32
    %8 = vector.broadcast %cst : f32 to vector<8x256xf32>
    %9 = arith.maximumf %8, %7 : vector<8x256xf32>
    %10 = vector.broadcast %cst_5 : f32 to vector<8x256xf32>
    %11 = arith.minimumf %10, %9 : vector<8x256xf32>
    %12 = vector.broadcast %1 : f32 to vector<8x256xf32>
    %13 = arith.subf %11, %12 : vector<8x256xf32>
    %14 = vector.broadcast %0 : f32 to vector<8x256xf32>
    %15 = arith.mulf %13, %14 : vector<8x256xf32>
    %c0_6 = arith.constant 0 : index
    %c0_7 = arith.constant 0 : index
    %16 = vector.load %arg4[%c0_6, %c0_7] : memref<8x256xf32, #tpu.memory_space<vmem>>, vector<8x256xf32>
    tpu.vector_store %arg4[%c0_6, %c0_7], %15 {strides = array<i32>} : memref<8x256xf32, #tpu.memory_space<vmem>>, vector<8x256xf32>,
    return
  }
  func.func @transform_0(%arg0: i32) -> (i32, i32) {
    %c0_i32 = arith.constant 0 : i32
    %c0_i32_0 = arith.constant 0 : i32
    %c0_i32_1 = arith.constant 0 : i32
    return %c0_i32, %c0_i32_0 : i32, i32
  }
  func.func @transform_1(%arg0: i32) -> (i32, i32) {
    %c0_i32 = arith.constant 0 : i32
    %c0_i32_0 = arith.constant 0 : i32
    %c0_i32_1 = arith.constant 0 : i32
    return %c0_i32, %c0_i32_0 : i32, i32
  }
  func.func @transform_2(%arg0: i32) -> (i32, i32) {
    %c0_i32 = arith.constant 0 : i32
    %c0_i32_0 = arith.constant 0 : i32
    return %arg0, %c0_i32 : i32, i32
  }
  func.func @transform_3(%arg0: i32) -> (i32, i32) {
    %c0_i32 = arith.constant 0 : i32
    %c0_i32_0 = arith.constant 0 : i32
    return %arg0, %c0_i32 : i32, i32
  }
}

</mosaic_0001>

<llo_original>
// kernel: tpu_custom_call.1
$region0: #{tpu_custom_call.1}
  #allocation0 [shape = 'u32[]', space=smem, size = 0x4, offset = 0x4, fixed_abs, tag = 'smem constant byte address 0x4 - core index']
  #allocation1 [shape = 'u32[72,128]{1,0:T(1,128)}', space=vmem, size = 0x9000, scoped, tag = 'internal scratch']
  #allocation2 [shape = 'f32[1,1]{1,0:T(1,128)S(6)}', space=smem, size = 0x200, scoped, tag = 'scoped memory for tpu_custom_call.1']
  #allocation3 [shape = 'f32[1,1]{1,0:T(1,128)S(6)}', space=smem, size = 0x200, scoped, tag = 'scoped memory for tpu_custom_call.1']
  %s0 = inlined_call_operand.<no memory space> [shape: f32[1,1], index: 0, kind: input, shape index: {}]
  %s1 = inlined_call_operand.<no memory space> [shape: f32[1,1], index: 1, kind: input, shape index: {}]
  %s2 = inlined_call_operand.hbm [shape: f32[8,256], index: 2, kind: input, shape index: {}]
  %s3 = inlined_call_operand.hbm [shape: f32[8,256], index: 3, kind: output, shape index: {}]
  %s4 = sld [smem:[#allocation0]]
  $region26: #{tpu_custom_call.1} parent=0
    _
  %s6 = ssub.s32 1, %s4
  %s7 = scalar_select 0, %s6, %s4
  %8 = sst [smem:[#allocation2]] %s0
  %9 = sst [smem:[#allocation3]] %s1
  $region1: #{tpu_custom_call.1} parent=0
    #allocation4 [shape = 'u8[8192]{0}', space=vmem, size = 0x2000, scoped, tag = 'input window, operand 2, single buffered']
    #allocation5 [shape = 's32[1]{0}', space=sflag, size = 0x4, scoped, tag = 'scoped memory for tpu_custom_call.1']
    #allocation6 [shape = 's32[1]{0}', space=sflag, size = 0x4, scoped, tag = 'scoped memory for tpu_custom_call.1']
    #allocation7 [shape = 'u8[8192]{0}', space=vmem, size = 0x2000, scoped, tag = 'output window, operand 0, single buffered']
    %10 = vsyncpa [#allocation5], 0
    %11 = vsyncpa [#allocation6], 0
    // Predicated region
    $region2: #{tpu_custom_call.1} parent=1 // pred_check
      _
    $region3: #{tpu_custom_call.1} parent=1 // pred_check_branch
      %13 = sbr.rel (0) target = $region5
    $region4: #{tpu_custom_call.1} parent=1 // pred_region
      _
    $region5: #{tpu_custom_call.1} parent=1 // pred_fallthru
      _
    // Predicated region
    $region6: #{tpu_custom_call.1} parent=1 // pred_check
      _
    $region7: #{tpu_custom_call.1} parent=1 // pred_check_branch
      %15 = sbr.rel (0) target = $region9
    $region8: #{tpu_custom_call.1} parent=1 // pred_region
      _
    $region9: #{tpu_custom_call.1} parent=1 // pred_fallthru
      _
    // Predicated region
    $region10: #{tpu_custom_call.1} parent=1 // pred_check
      _
    $region11: #{tpu_custom_call.1} parent=1 // pred_check_branch
      %17 = sbr.rel (0) target = $region13
    $region12: #{tpu_custom_call.1} parent=1 // pred_region
      %19 = vsyncadd [#allocation5], 0
      %s21 = sshll.u32 %s2, 4
      %s22 = int_to_ptr.hbm [resolvable:$true] %s21
      %s23 = sshll.u32 [#allocation4], 4
      %s24 = int_to_ptr.vmem [resolvable:$true] %s23
      %26 = dma.hbm_to_vmem [thread:$0]  %s22, 256, %s24, [#allocation5]
    $region13: #{tpu_custom_call.1} parent=1 // pred_fallthru
      _
    // Predicated region
    $region14: #{tpu_custom_call.1} parent=1 // pred_check
      _
    $region15: #{tpu_custom_call.1} parent=1 // pred_check_branch
      %28 = sbr.rel (0) target = $region17
    $region16: #{tpu_custom_call.1} parent=1 // pred_region
      %30 = dma.done [#allocation5], 256
    $region17: #{tpu_custom_call.1} parent=1 // pred_fallthru
      _
    %s31 = sld [smem:[#allocation2]]
    %s32 = sld [smem:[#allocation3]]
    %v33 = vld [vmem:[#allocation4] sm:$0xff]
    %v34 = vld [vmem:[#allocation4 + $0x8] sm:$0xff]
    %v35 = vstv %s31
    %v36 = vrcp.pop %v35
    %v37 = vmul.f32 %v35, %v36
    %v38 = vsub.f32 1.0, %v37
    %v39 = vmul.f32 %v36, %v38
    %v40 = vadd.f32 %v36, %v39
    %vm41 = vweird.f32 %v35
    %vm42 = vweird.f32 %v36
    %vm43 = vmor %vm41, %vm42
    %v44 = vsel %vm43, %v36, %v40
    %v45 = vand.u32 2147483647, %v35
    %vm46 = vcmp.eq.f32.partialorder %v45, 8.507059e+37
    %v47 = vand.u32 %v35, 2147483648
    %v48 = vor.u32 1.1754944e-38, %v47
    %v49 = vsel %vm46, %v48, %v44
    %v50 = vmul.f32 %v33, %v49
    %v51 = vmul.f32 %v34, %v49
    %v52 = vround.ne.pseudo %v50
    %v53 = vround.ne.pseudo %v51
    %v54 = vstv %s32
    %v55 = vadd.f32 %v52, %v54
    %v56 = vadd.f32 %v53, %v54
    %v57 = vmax.f32 %v55, 0.0
    %v58 = vmax.f32 %v56, 0.0
    %v59 = vmin.f32 %v57, 255.0
    %v60 = vmin.f32 %v58, 255.0
    %v61 = vsub.f32 %v59, %v54
    %v62 = vsub.f32 %v60, %v54
    %v63 = vmul.f32 %v61, %v35
    %v64 = vmul.f32 %v62, %v35
    %65 = vst [vmem:[#allocation7] sm:$0xff] %v63
    %66 = vst [vmem:[#allocation7 + $0x8] sm:$0xff] %v64
    // Predicated region
    $region18: #{tpu_custom_call.1} parent=1 // pred_check
      _
    $region19: #{tpu_custom_call.1} parent=1 // pred_check_branch
      %68 = sbr.rel (0) target = $region21
    $region20: #{tpu_custom_call.1} parent=1 // pred_region
      %70 = vsyncadd [#allocation6], 0
      %s72 = sshll.u32 [#allocation7], 4
      %s73 = int_to_ptr.vmem [resolvable:$true] %s72
      %s74 = sshll.u32 %s3, 4
      %s75 = int_to_ptr.hbm [resolvable:$true] %s74
      %77 = dma.vmem_to_hbm [thread:$0]  %s73, 256, %s75, [#allocation6]
    $region21: #{tpu_custom_call.1} parent=1 // pred_fallthru
      _
    // Predicated region
    $region22: #{tpu_custom_call.1} parent=1 // pred_check
      _
    $region23: #{tpu_custom_call.1} parent=1 // pred_check_branch
      %79 = sbr.rel (0) target = $region25
    $region24: #{tpu_custom_call.1} parent=1 // pred_region
      %81 = dma.done [#allocation6], 256
    $region25: #{tpu_custom_call.1} parent=1 // pred_fallthru
      _
    %82 = vsyncpa [#allocation5], 1
    %83 = vsyncpa [#allocation6], 1

</llo_original>
